<compile_context>
chip_gen: v7x
topology: tpu7x:2x2x1
jax: 0.10.0
libtpu: 0.0.40
codegen_flags: <defaults>
</compile_context>

<pallas_src>
import jax
import jax.numpy as jnp
from jax.experimental import pallas as pl
from jax.experimental.pallas import tpu as pltpu

IN_FEATURES = 64
HIDDEN = 100
H_PAD = 128  # hidden padded to the 128-lane vreg width


def _round_up(n, m):
    return ((n + m - 1) // m) * m


def _mlp_kernel(x_ref, w1_ref, b1_ref, w2_ref, b2_ref, o_ref):
    # x_ref: (TB, 64)      VMEM  (batch tile)
    # w1_ref: (64, 128)    VMEM  (resident, W1.T zero-padded to 128 hidden)
    # b1_ref: (1, 128)     VMEM  (resident)
    # w2_ref: (1, 128)     VMEM  (resident, W2 as a zero-padded row)
    # b2_ref: (1, 1)       SMEM  (scalar bias)
    # o_ref: (TB, 1)       VMEM
    x = x_ref[...]

    # Hidden layer: (TB, 64) @ (64, 128) on the MXU, then bias + ReLU on VPU.
    h = jnp.dot(x, w1_ref[...], preferred_element_type=jnp.float32)
    h = jnp.maximum(h + b1_ref[...], 0.0)

    # Output layer (N=1): broadcast-multiply + lane reduction instead of an
    # N=1 MXU matmul; runs in otherwise-idle VPU/XLU slots.
    y = jnp.sum(h * w2_ref[...], axis=-1, keepdims=True) + b2_ref[0, 0]

    # Sigmoid: exp and the (approx) reciprocal both go to the EUP slot.
    o_ref[...] = pl.reciprocal(1.0 + jnp.exp(-y), approx=True).astype(o_ref.dtype)


def nn_one_hidden_forward(x, w1t, b1, w2t, b2, *, block_b=4096):
    """x: (B, 8, 8) or (B, 64) float32. Returns (B, 1) float32."""
    B = x.shape[0]
    x2d = x.reshape(B, -1).astype(jnp.float32)  # nn.Flatten()
    assert x2d.shape[1] == IN_FEATURES, (
        f"expected {IN_FEATURES} flattened features, got {x2d.shape[1]}")

    hidden = w1t.shape[1]
    assert hidden == HIDDEN and w2t.shape == (hidden, 1)

    # Zero-pad hidden 100 -> 128 (exact: see header comment).
    w1p = jnp.zeros((IN_FEATURES, H_PAD), jnp.float32).at[:, :hidden].set(
        w1t.astype(jnp.float32))
    b1p = jnp.zeros((1, H_PAD), jnp.float32).at[:, :hidden].set(
        b1.reshape(1, hidden).astype(jnp.float32))
    w2row = jnp.zeros((1, H_PAD), jnp.float32).at[:, :hidden].set(
        w2t.reshape(1, hidden).astype(jnp.float32))
    b2s = jnp.asarray(b2, jnp.float32).reshape(1, 1)

    # Batch tiling: TB rows per grid step (multiple of 128), pad B up to a
    # whole number of tiles; padded rows are computed then sliced off.
    TB = min(block_b, _round_up(B, 128))
    num_tiles = pl.cdiv(B, TB)
    B_pad = num_tiles * TB
    if B_pad != B:
        x2d = jnp.pad(x2d, ((0, B_pad - B), (0, 0)))

    out = pl.pallas_call(
        _mlp_kernel,
        out_shape=jax.ShapeDtypeStruct((B_pad, 1), jnp.float32),
        grid_spec=pltpu.PrefetchScalarGridSpec(
            num_scalar_prefetch=0,
            grid=(num_tiles,),
            in_specs=[
                pl.BlockSpec((TB, IN_FEATURES), lambda i: (i, 0)),   # x tile
                pl.BlockSpec((IN_FEATURES, H_PAD), lambda i: (0, 0)),  # w1 (resident)
                pl.BlockSpec((1, H_PAD), lambda i: (0, 0)),            # b1 (resident)
                pl.BlockSpec((1, H_PAD), lambda i: (0, 0)),            # w2 row (resident)
                pl.BlockSpec(memory_space=pltpu.MemorySpace.SMEM),     # b2 scalar
            ],
            out_specs=pl.BlockSpec((TB, 1), lambda i: (i, 0)),
        ),
        compiler_params=pltpu.CompilerParams(
            dimension_semantics=("parallel",)),
    )(x2d, w1p, b1p, w2row, b2s)

    return out[:B]


def init_params(key):
    """Deterministic init matching nn.Linear default (U(-1/sqrt(fan_in), +...))."""
    k1, k2, k3, k4 = jax.random.split(key, 4)
    bound1 = 1.0 / jnp.sqrt(64.0)
    bound2 = 1.0 / jnp.sqrt(100.0)
    # Stored pre-transposed for the kernel: W1.T -> (64, 100), W2.T -> (100, 1)
    w1t = jax.random.uniform(k1, (64, 100), jnp.float32, -bound1, bound1)
    b1 = jax.random.uniform(k2, (1, 100), jnp.float32, -bound1, bound1)
    w2t = jax.random.uniform(k3, (100, 1), jnp.float32, -bound2, bound2)
    b2 = jax.random.uniform(k4, (1, 1), jnp.float32, -bound2, bound2)
    return w1t, b1, w2t, b2


if __name__ == "__main__":
    key = jax.random.PRNGKey(0)
    kx, kp = jax.random.split(key)

    # Small deterministic example input: batch=2, 8x8 "lattice" -> 64 features.
    x = jax.random.normal(kx, (2, 8, 8), dtype=jnp.float32)
    w1t, b1, w2t, b2 = init_params(kp)

    out = nn_one_hidden_forward(x, w1t, b1, w2t, b2)
    out = jax.block_until_ready(out)

    # Pure-JAX reference check (same math, no Pallas).  Tolerance accommodates
    # the EUP approximate reciprocal in the sigmoid (~1e-4 absolute); set
    # approx=False in the kernel for bit-level parity if required.
    x2d = x.reshape(2, -1)
    ref = jax.nn.sigmoid(jnp.maximum(x2d @ w1t + b1, 0.0) @ w2t + b2)
    assert out.shape == (2, 1)
    assert jnp.allclose(out, ref, atol=2e-3, rtol=2e-3), "mismatch vs reference"

    print("KERNEL_OK")
</pallas_src>

<mosaic_0001>
module attributes {stable_mosaic.version = 11 : i64} {
  func.func @_mlp_kernel(%arg0: i32, %arg1: memref<128x64xf32, #tpu.memory_space<vmem>>, %arg2: memref<64x128xf32, #tpu.memory_space<vmem>>, %arg3: memref<1x128xf32, #tpu.memory_space<vmem>>, %arg4: memref<1x128xf32, #tpu.memory_space<vmem>>, %arg5: memref<1x1xf32, #tpu.memory_space<smem>>, %arg6: memref<128x1xf32, #tpu.memory_space<vmem>>) attributes {dimension_semantics = [#tpu.dimension_semantics<parallel>], iteration_bounds = array<i64: 1>, scalar_prefetch = 0 : i64, scratch_operands = 0 : i64, tpu.core_type = #tpu.core_type<tc>, window_params = [{transform_indices = @transform_0, window_bounds = array<i64: 128, 64>}, {pipeline_mode = #tpu.pipeline_mode<synchronous>, transform_indices = @transform_1, window_bounds = array<i64: 64, 128>}, {pipeline_mode = #tpu.pipeline_mode<synchronous>, transform_indices = @transform_2, window_bounds = array<i64: 1, 128>}, {pipeline_mode = #tpu.pipeline_mode<synchronous>, transform_indices = @transform_3, window_bounds = array<i64: 1, 128>}, {transform_indices = @transform_4, window_bounds = array<i64: 1, 1>}, {transform_indices = @transform_5, window_bounds = array<i64: 128, 1>}]} {
    %c0 = arith.constant 0 : index
    %c0_0 = arith.constant 0 : index
    %0 = vector.load %arg1[%c0, %c0_0] : memref<128x64xf32, #tpu.memory_space<vmem>>, vector<128x64xf32>
    %c0_1 = arith.constant 0 : index
    %c0_2 = arith.constant 0 : index
    %1 = vector.load %arg2[%c0_1, %c0_2] : memref<64x128xf32, #tpu.memory_space<vmem>>, vector<64x128xf32>
    %cst = arith.constant dense<0.000000e+00> : vector<128x128xf32>
    %2 = tpu.matmul %0, %1, %cst {dimension_numbers = #tpu.dot_dimension_numbers<[1], [0], [0], [1], [0, 0, 1, 1], [], []>} : vector<128x64xf32>, vector<64x128xf32>, vector<128x128xf32> -> vector<128x128xf32>
    %c0_3 = arith.constant 0 : index
    %c0_4 = arith.constant 0 : index
    %3 = vector.load %arg3[%c0_3, %c0_4] : memref<1x128xf32, #tpu.memory_space<vmem>>, vector<1x128xf32>
    %4 = vector.broadcast %3 : vector<1x128xf32> to vector<128x128xf32>
    %5 = arith.addf %2, %4 : vector<128x128xf32>
    %cst_5 = arith.constant 0.000000e+00 : f32
    %6 = vector.broadcast %cst_5 : f32 to vector<128x128xf32>
    %7 = arith.maximumf %5, %6 : vector<128x128xf32>
    %c0_6 = arith.constant 0 : index
    %c0_7 = arith.constant 0 : index
    %8 = vector.load %arg4[%c0_6, %c0_7] : memref<1x128xf32, #tpu.memory_space<vmem>>, vector<1x128xf32>
    %9 = vector.broadcast %8 : vector<1x128xf32> to vector<128x128xf32>
    %10 = arith.mulf %7, %9 : vector<128x128xf32>
    %cst_8 = arith.constant dense<0.000000e+00> : vector<128xf32>
    %11 = vector.multi_reduction <add>, %10, %cst_8 [1] : vector<128x128xf32> to vector<128xf32>
    %12 = vector.shape_cast %11 : vector<128xf32> to vector<128x1xf32>
    %c0_9 = arith.constant 0 : index
    %c0_10 = arith.constant 0 : index
    %13 = memref.load %arg5[%c0_9, %c0_10] : memref<1x1xf32, #tpu.memory_space<smem>>
    %14 = vector.broadcast %13 : f32 to vector<128x1xf32>
    %15 = arith.addf %12, %14 : vector<128x1xf32>
    %cst_11 = arith.constant 0.000000e+00 : f32
    %16 = vector.broadcast %cst_11 : f32 to vector<128x1xf32>
    %17 = arith.subf %16, %15 : vector<128x1xf32>
    %18 = math.exp %17 : vector<128x1xf32>
    %cst_12 = arith.constant 1.000000e+00 : f32
    %19 = vector.broadcast %cst_12 : f32 to vector<128x1xf32>
    %20 = arith.addf %19, %18 : vector<128x1xf32>
    %21 = tpu.reciprocal %20 {approx = true} : vector<128x1xf32> -> vector<128x1xf32>
    %c0_13 = arith.constant 0 : index
    %c0_14 = arith.constant 0 : index
    %22 = vector.load %arg6[%c0_13, %c0_14] : memref<128x1xf32, #tpu.memory_space<vmem>>, vector<128x1xf32>
    tpu.vector_store %arg6[%c0_13, %c0_14], %21 {strides = array<i32>} : memref<128x1xf32, #tpu.memory_space<vmem>>, vector<128x1xf32>,
    return
  }
  func.func @transform_0(%arg0: i32) -> (i32, i32) {
    %c0_i32 = arith.constant 0 : i32
    %c0_i32_0 = arith.constant 0 : i32
    return %arg0, %c0_i32 : i32, i32
  }
  func.func @transform_1(%arg0: i32) -> (i32, i32) {
    %c0_i32 = arith.constant 0 : i32
    %c0_i32_0 = arith.constant 0 : i32
    %c0_i32_1 = arith.constant 0 : i32
    return %c0_i32, %c0_i32_0 : i32, i32
  }
  func.func @transform_2(%arg0: i32) -> (i32, i32) {
    %c0_i32 = arith.constant 0 : i32
    %c0_i32_0 = arith.constant 0 : i32
    %c0_i32_1 = arith.constant 0 : i32
    return %c0_i32, %c0_i32_0 : i32, i32
  }
  func.func @transform_3(%arg0: i32) -> (i32, i32) {
    %c0_i32 = arith.constant 0 : i32
    %c0_i32_0 = arith.constant 0 : i32
    %c0_i32_1 = arith.constant 0 : i32
    return %c0_i32, %c0_i32_0 : i32, i32
  }
  func.func @transform_4(%arg0: i32) -> (i32, i32) {
    %c0_i32 = arith.constant 0 : i32
    %c0_i32_0 = arith.constant 0 : i32
    %c0_i32_1 = arith.constant 0 : i32
    return %c0_i32, %c0_i32_0 : i32, i32
  }
  func.func @transform_5(%arg0: i32) -> (i32, i32) {
    %c0_i32 = arith.constant 0 : i32
    %c0_i32_0 = arith.constant 0 : i32
    return %arg0, %c0_i32 : i32, i32
  }
}

</mosaic_0001>

<llo_original>
// kernel: tpu_custom_call.1
$region0: #{tpu_custom_call.1}
  #allocation0 [shape = 'u32[]', space=smem, size = 0x4, offset = 0x4, fixed_abs, tag = 'smem constant byte address 0x4 - core index']
  #allocation1 [shape = 'u32[144,128]{1,0:T(1,128)}', space=vmem, size = 0x12000, scoped, tag = 'internal scratch']
  #allocation2 [shape = 'f32[1,1]{1,0:T(1,128)S(6)}', space=smem, size = 0x200, scoped, tag = 'scoped memory for tpu_custom_call.1']
  %s0 = inlined_call_operand.vmem [shape: f32[128,64], index: 0, kind: input, shape index: {}]
  %s1 = inlined_call_operand.vmem [shape: f32[64,128], index: 1, kind: input, shape index: {}]
  %s2 = inlined_call_operand.vmem [shape: f32[1,128], index: 2, kind: input, shape index: {}]
  %s3 = inlined_call_operand.vmem [shape: f32[1,128], index: 3, kind: input, shape index: {}]
  %s4 = inlined_call_operand.<no memory space> [shape: f32[1,1], index: 4, kind: input, shape index: {}]
  %s5 = inlined_call_operand.vmem [shape: f32[128,1], index: 5, kind: output, shape index: {}]
  %s6 = sld [smem:[#allocation0]]
  $region30: #{tpu_custom_call.1} parent=0
    _
  %s8 = ssub.s32 1, %s6
  %s9 = scalar_select 0, %s8, %s6
  %10 = sst [smem:[#allocation2]] %s4
  // Predicated region
  $region2: #{tpu_custom_call.1} parent=0 // pred_check
    _
  $region3: #{tpu_custom_call.1} parent=0 // pred_check_branch
    %12 = sbr.rel (0) target = $region5
  $region4: #{tpu_custom_call.1} parent=0 // pred_region
    _
  $region5: #{tpu_custom_call.1} parent=0 // pred_fallthru
    _
  // Predicated region
  $region6: #{tpu_custom_call.1} parent=0 // pred_check
    _
  $region7: #{tpu_custom_call.1} parent=0 // pred_check_branch
    %14 = sbr.rel (0) target = $region9
  $region8: #{tpu_custom_call.1} parent=0 // pred_region
    _
  $region9: #{tpu_custom_call.1} parent=0 // pred_fallthru
    _
  // Predicated region
  $region10: #{tpu_custom_call.1} parent=0 // pred_check
    _
  $region11: #{tpu_custom_call.1} parent=0 // pred_check_branch
    %16 = sbr.rel (0) target = $region13
  $region12: #{tpu_custom_call.1} parent=0 // pred_region
    _
  $region13: #{tpu_custom_call.1} parent=0 // pred_fallthru
    _
  // Predicated region
  $region14: #{tpu_custom_call.1} parent=0 // pred_check
    _
  $region15: #{tpu_custom_call.1} parent=0 // pred_check_branch
    %18 = sbr.rel (0) target = $region17
  $region16: #{tpu_custom_call.1} parent=0 // pred_region
    _
  $region17: #{tpu_custom_call.1} parent=0 // pred_fallthru
    _
  // Predicated region
  $region18: #{tpu_custom_call.1} parent=0 // pred_check
    _
  $region19: #{tpu_custom_call.1} parent=0 // pred_check_branch
    %20 = sbr.rel (0) target = $region21
  $region20: #{tpu_custom_call.1} parent=0 // pred_region
    _
  $region21: #{tpu_custom_call.1} parent=0 // pred_fallthru
    _
  %v21 = vld [vmem:[%s0] sm:$0xff]
  %v22 = vld [vmem:[%s0 + $0x8] sm:$0xff]
  %v23 = vld [vmem:[%s0 + $0x10] sm:$0xff]
  %v24 = vld [vmem:[%s0 + $0x18] sm:$0xff]
  %v25 = vld [vmem:[%s0 + $0x20] sm:$0xff]
  %v26 = vld [vmem:[%s0 + $0x28] sm:$0xff]
  %v27 = vld [vmem:[%s0 + $0x30] sm:$0xff]
  %v28 = vld [vmem:[%s0 + $0x38] sm:$0xff]
  %v29 = vld [vmem:[%s0 + $0x40] sm:$0xff]
  %v30 = vld [vmem:[%s0 + $0x48] sm:$0xff]
  %v31 = vld [vmem:[%s0 + $0x50] sm:$0xff]
  %v32 = vld [vmem:[%s0 + $0x58] sm:$0xff]
  %v33 = vld [vmem:[%s0 + $0x60] sm:$0xff]
  %v34 = vld [vmem:[%s0 + $0x68] sm:$0xff]
  %v35 = vld [vmem:[%s0 + $0x70] sm:$0xff]
  %v36 = vld [vmem:[%s0 + $0x78] sm:$0xff]
  %v37 = vld [vmem:[%s1] sm:$0xff]
  %v38 = vld [vmem:[%s1 + $0x8] sm:$0xff]
  %v39 = vld [vmem:[%s1 + $0x10] sm:$0xff]
  %v40 = vld [vmem:[%s1 + $0x18] sm:$0xff]
  %v41 = vld [vmem:[%s1 + $0x20] sm:$0xff]
  %v42 = vld [vmem:[%s1 + $0x28] sm:$0xff]
  %v43 = vld [vmem:[%s1 + $0x30] sm:$0xff]
  %v44 = vld [vmem:[%s1 + $0x38] sm:$0xff]
  %v45 = vld [vmem:[%s2] sm:$0x1]
  %v47 = vlaneseq
  %v48 = vshrl.u32 %v47, 7
  %v49 = vsub.s32 0, %v48
  %v50 = vrot.slane %v45, %v49
  %vm52 = vcmask 523264
  %v54 = vsel %vm52, %v21, 0
  %v57 = vsel %vm52, %v22, 0
  %v60 = vsel %vm52, %v23, 0
  %v63 = vsel %vm52, %v24, 0
  %v66 = vsel %vm52, %v25, 0
  %v69 = vsel %vm52, %v26, 0
  %v72 = vsel %vm52, %v27, 0
  %v75 = vsel %vm52, %v28, 0
  %v78 = vsel %vm52, %v29, 0
  %v81 = vsel %vm52, %v30, 0
  %v84 = vsel %vm52, %v31, 0
  %v87 = vsel %vm52, %v32, 0
  %v90 = vsel %vm52, %v33, 0
  %v93 = vsel %vm52, %v34, 0
  %v96 = vsel %vm52, %v35, 0
  %v99 = vsel %vm52, %v36, 0
  %101 = vmatprep.subr.mxu0 0.0
  %102 = vmatpush1.msra.mxu0 %v37
  %103 = vmatprep.subr.mxu0 0.0
  %104 = vmatpush1.msra.mxu0 %v38
  %105 = vmatprep.subr.mxu0 0.0
  %106 = vmatpush1.msra.mxu0 %v39
  %107 = vmatprep.subr.mxu0 0.0
  %108 = vmatpush1.msra.mxu0 %v40
  %109 = vmatprep.subr.mxu0 0.0
  %110 = vmatpush1.msra.mxu0 %v41
  %111 = vmatprep.subr.mxu0 0.0
  %112 = vmatpush1.msra.mxu0 %v42
  %113 = vmatprep.subr.mxu0 0.0
  %114 = vmatpush1.msra.mxu0 %v43
  %115 = vmatprep.subr.mxu0 0.0
  %116 = vmatpush1.msra.mxu0 %v44
  %117 = vmatprep.subr.mxu0 0.0
  %118 = vmatpush1.msra.mxu0 0.0
  %119 = vmatprep.subr.mxu0 0.0
  %120 = vmatpush1.msra.mxu0 0.0
  %121 = vmatprep.subr.mxu0 0.0
  %122 = vmatpush1.msra.mxu0 0.0
  %123 = vmatprep.subr.mxu0 0.0
  %124 = vmatpush1.msra.mxu0 0.0
  %125 = vmatprep.subr.mxu0 0.0
  %126 = vmatpush1.msra.mxu0 0.0
  %127 = vmatprep.subr.mxu0 0.0
  %128 = vmatpush1.msra.mxu0 0.0
  %129 = vmatprep.subr.mxu0 0.0
  %130 = vmatpush1.msra.mxu0 0.0
  %131 = vmatprep.subr.mxu0 0.0
  %132 = vmatpush1.msra.mxu0 0.0
  %133 = vmatprep.subr.mxu0 0.0
  %134 = vmatpush1.msra.mxu0 0.0
  %135 = vmatprep.subr.mxu0 0.0
  %136 = vmatpush1.msra.mxu0 0.0
  %137 = vmatprep.subr.mxu0 0.0
  %138 = vmatpush1.msra.mxu0 0.0
  %139 = vmatprep.subr.mxu0 0.0
  %140 = vmatpush1.msra.mxu0 0.0
  %141 = vmatprep.subr.mxu0 0.0
  %142 = vmatpush1.msra.mxu0 0.0
  %143 = vmatprep.subr.mxu0 0.0
  %144 = vmatpush1.msra.mxu0 0.0
  %145 = vmatprep.subr.mxu0 0.0
  %146 = vmatpush1.msra.mxu0 0.0
  %147 = vmatprep.subr.mxu0 0.0
  %148 = vmatpush1.msra.mxu0 0.0
  %149 = vmatprep.subr.mxu0 0.0
  %150 = vmatpush1.msra.mxu0 0.0
  %151 = vmatprep.subr.mxu0 0.0
  %152 = vmatpush1.msra.mxu0 0.0
  %153 = vmatprep.subr.mxu0 0.0
  %154 = vmatpush1.msra.mxu0 0.0
  %155 = vmatprep.subr.mxu0 0.0
  %156 = vmatpush1.msra.mxu0 0.0
  %157 = vmatprep.subr.mxu0 0.0
  %158 = vmatpush1.msra.mxu0 0.0
  %159 = vmatprep.subr.mxu0 0.0
  %160 = vmatpush1.msra.mxu0 0.0
  %161 = vmatprep.subr.mxu0 0.0
  %162 = vmatpush1.msra.mxu0 0.0
  %163 = vmatprep.subr.mxu0 0.0
  %164 = vmatpush1.msra.mxu0 0.0
  %165 = vmatprep.mubr.f32.mxu0 0.0
  %166 = vmatmul.mubr.f32.gmra.mrb[0].mxu0 %v54
  %v167 = vpop.f32.mrb[0].mxu0
  %v168 = vadd.f32 %v50, %v167
  %v169 = vpop.f32.mrb[0].mxu0
  %170 = vmatprep.mubr.f32.mxu0 0.0
  %171 = vmatmul.mubr.f32.gmra.mrb[0].mxu0 %v57
  %v172 = vpop.f32.mrb[0].mxu0
  %v173 = vadd.f32 %v50, %v172
  %v174 = vpop.f32.mrb[0].mxu0
  %175 = vmatprep.mubr.f32.mxu0 0.0
  %176 = vmatmul.mubr.f32.gmra.mrb[0].mxu0 %v60
  %v177 = vpop.f32.mrb[0].mxu0
  %v178 = vadd.f32 %v50, %v177
  %v179 = vpop.f32.mrb[0].mxu0
  %180 = vmatprep.mubr.f32.mxu0 0.0
  %181 = vmatmul.mubr.f32.gmra.mrb[0].mxu0 %v63
  %v182 = vpop.f32.mrb[0].mxu0
  %v183 = vadd.f32 %v50, %v182
  %v184 = vpop.f32.mrb[0].mxu0
  %185 = vmatprep.mubr.f32.mxu0 0.0
  %186 = vmatmul.mubr.f32.gmra.mrb[0].mxu0 %v66
  %v187 = vpop.f32.mrb[0].mxu0
  %v188 = vadd.f32 %v50, %v187
  %v189 = vpop.f32.mrb[0].mxu0
  %190 = vmatprep.mubr.f32.mxu0 0.0
  %191 = vmatmul.mubr.f32.gmra.mrb[0].mxu0 %v69
  %v192 = vpop.f32.mrb[0].mxu0
  %v193 = vadd.f32 %v50, %v192
  %v194 = vpop.f32.mrb[0].mxu0
  %195 = vmatprep.mubr.f32.mxu0 0.0
  %196 = vmatmul.mubr.f32.gmra.mrb[0].mxu0 %v72
  %v197 = vpop.f32.mrb[0].mxu0
  %v198 = vadd.f32 %v50, %v197
  %v199 = vpop.f32.mrb[0].mxu0
  %200 = vmatprep.mubr.f32.mxu0 0.0
  %201 = vmatmul.mubr.f32.gmra.mrb[0].mxu0 %v75
  %v202 = vpop.f32.mrb[0].mxu0
  %v203 = vadd.f32 %v50, %v202
  %v204 = vpop.f32.mrb[0].mxu0
  %205 = vmatprep.mubr.f32.mxu0 0.0
  %206 = vmatmul.mubr.f32.gmra.mrb[0].mxu0 %v78
  %v207 = vpop.f32.mrb[0].mxu0
  %v208 = vadd.f32 %v50, %v207
  %v209 = vpop.f32.mrb[0].mxu0
  %210 = vmatprep.mubr.f32.mxu0 0.0
  %211 = vmatmul.mubr.f32.gmra.mrb[0].mxu0 %v81
  %v212 = vpop.f32.mrb[0].mxu0
  %v213 = vadd.f32 %v50, %v212
  %v214 = vpop.f32.mrb[0].mxu0
  %215 = vmatprep.mubr.f32.mxu0 0.0
  %216 = vmatmul.mubr.f32.gmra.mrb[0].mxu0 %v84
  %v217 = vpop.f32.mrb[0].mxu0
  %v218 = vadd.f32 %v50, %v217
  %v219 = vpop.f32.mrb[0].mxu0
  %220 = vmatprep.mubr.f32.mxu0 0.0
  %221 = vmatmul.mubr.f32.gmra.mrb[0].mxu0 %v87
  %v222 = vpop.f32.mrb[0].mxu0
  %v223 = vadd.f32 %v50, %v222
  %v224 = vpop.f32.mrb[0].mxu0
  %225 = vmatprep.mubr.f32.mxu0 0.0
  %226 = vmatmul.mubr.f32.gmra.mrb[0].mxu0 %v90
  %v227 = vpop.f32.mrb[0].mxu0
  %v228 = vadd.f32 %v50, %v227
  %v229 = vpop.f32.mrb[0].mxu0
  %230 = vmatprep.mubr.f32.mxu0 0.0
  %231 = vmatmul.mubr.f32.gmra.mrb[0].mxu0 %v93
  %v232 = vpop.f32.mrb[0].mxu0
  %v233 = vadd.f32 %v50, %v232
  %v234 = vpop.f32.mrb[0].mxu0
  %235 = vmatprep.mubr.f32.mxu0 0.0
  %236 = vmatmul.mubr.f32.gmra.mrb[0].mxu0 %v96
  %v237 = vpop.f32.mrb[0].mxu0
  %v238 = vadd.f32 %v50, %v237
  %v239 = vpop.f32.mrb[0].mxu0
  %240 = vmatprep.mubr.f32.mxu0 0.0
  %241 = vmatmul.mubr.f32.gmra.mrb[0].mxu0 %v99
  %v242 = vpop.f32.mrb[0].mxu0
  %v243 = vadd.f32 %v50, %v242
  %v244 = vpop.f32.mrb[0].mxu0
  %245 = vdwg.mxu0
  %v246 = vmax.f32 %v168, 0.0
  %v247 = vmax.f32 %v173, 0.0
  %v248 = vmax.f32 %v178, 0.0
  %v249 = vmax.f32 %v183, 0.0
  %v250 = vmax.f32 %v188, 0.0
  %v251 = vmax.f32 %v193, 0.0
  %v252 = vmax.f32 %v198, 0.0
  %v253 = vmax.f32 %v203, 0.0
  %v254 = vmax.f32 %v208, 0.0
  %v255 = vmax.f32 %v213, 0.0
  %v256 = vmax.f32 %v218, 0.0
  %v257 = vmax.f32 %v223, 0.0
  %v258 = vmax.f32 %v228, 0.0
  %v259 = vmax.f32 %v233, 0.0
  %v260 = vmax.f32 %v238, 0.0
  %v261 = vmax.f32 %v243, 0.0
  %v262 = vld [vmem:[%s3] sm:$0x1]
  %v264 = vlaneseq
  %v265 = vshrl.u32 %v264, 7
  %v266 = vsub.s32 0, %v265
  %v267 = vrot.slane %v262, %v266
  %v269 = vmul.f32 %v246, %v267
  %v270 = vmul.f32 %v247, %v267
  %v271 = vmul.f32 %v248, %v267
  %v272 = vmul.f32 %v249, %v267
  %v273 = vmul.f32 %v250, %v267
  %v274 = vmul.f32 %v251, %v267
  %v275 = vmul.f32 %v252, %v267
  %v276 = vmul.f32 %v253, %v267
  %v277 = vmul.f32 %v254, %v267
  %v278 = vmul.f32 %v255, %v267
  %v279 = vmul.f32 %v256, %v267
  %v280 = vmul.f32 %v257, %v267
  %v281 = vmul.f32 %v258, %v267
  %v282 = vmul.f32 %v259, %v267
  %v283 = vmul.f32 %v260, %v267
  %v284 = vmul.f32 %v261, %v267
  %285 = vadd.xlane.f32.xlu0 %v269
  %v286 = vpop.xlane.xlu0 %285
  %287 = vadd.xlane.f32.xlu0 %v270
  %v288 = vpop.xlane.xlu0 %287
  %289 = vadd.xlane.f32.xlu0 %v271
  %v290 = vpop.xlane.xlu0 %289
  %291 = vadd.xlane.f32.xlu0 %v272
  %v292 = vpop.xlane.xlu0 %291
  %293 = vadd.xlane.f32.xlu0 %v273
  %v294 = vpop.xlane.xlu0 %293
  %295 = vadd.xlane.f32.xlu0 %v274
  %v296 = vpop.xlane.xlu0 %295
  %297 = vadd.xlane.f32.xlu0 %v275
  %v298 = vpop.xlane.xlu0 %297
  %299 = vadd.xlane.f32.xlu0 %v276
  %v300 = vpop.xlane.xlu0 %299
  %301 = vadd.xlane.f32.xlu0 %v277
  %v302 = vpop.xlane.xlu0 %301
  %303 = vadd.xlane.f32.xlu0 %v278
  %v304 = vpop.xlane.xlu0 %303
  %305 = vadd.xlane.f32.xlu0 %v279
  %v306 = vpop.xlane.xlu0 %305
  %307 = vadd.xlane.f32.xlu0 %v280
  %v308 = vpop.xlane.xlu0 %307
  %309 = vadd.xlane.f32.xlu0 %v281
  %v310 = vpop.xlane.xlu0 %309
  %311 = vadd.xlane.f32.xlu0 %v282
  %v312 = vpop.xlane.xlu0 %311
  %313 = vadd.xlane.f32.xlu0 %v283
  %v314 = vpop.xlane.xlu0 %313
  %315 = vadd.xlane.f32.xlu0 %v284
  %v316 = vpop.xlane.xlu0 %315
  %s317 = sld [smem:[#allocation2]]
  %v318 = vstv %s317
  %v319 = vadd.f32 %v286, %v318
  %v320 = vadd.f32 %v288, %v318
  %v321 = vadd.f32 %v290, %v318
  %v322 = vadd.f32 %v292, %v318
  %v323 = vadd.f32 %v294, %v318
  %v324 = vadd.f32 %v296, %v318
  %v325 = vadd.f32 %v298, %v318
  %v326 = vadd.f32 %v300, %v318
  %v327 = vadd.f32 %v302, %v318
  %v328 = vadd.f32 %v304, %v318
  %v329 = vadd.f32 %v306, %v318
  %v330 = vadd.f32 %v308, %v318
  %v331 = vadd.f32 %v310, %v318
  %v332 = vadd.f32 %v312, %v318
  %v333 = vadd.f32 %v314, %v318
  %v334 = vadd.f32 %v316, %v318
  %v335 = vsub.f32 0.0, %v319
  %v336 = vsub.f32 0.0, %v320
  %v337 = vsub.f32 0.0, %v321
  %v338 = vsub.f32 0.0, %v322
  %v339 = vsub.f32 0.0, %v323
  %v340 = vsub.f32 0.0, %v324
  %v341 = vsub.f32 0.0, %v325
  %v342 = vsub.f32 0.0, %v326
  %v343 = vsub.f32 0.0, %v327
  %v344 = vsub.f32 0.0, %v328
  %v345 = vsub.f32 0.0, %v329
  %v346 = vsub.f32 0.0, %v330
  %v347 = vsub.f32 0.0, %v331
  %v348 = vsub.f32 0.0, %v332
  %v349 = vsub.f32 0.0, %v333
  %v350 = vsub.f32 0.0, %v334
  %v351 = vmul.f32 %v335, 1.442695
  %v352 = vpow.pop %v351
  %v353 = vmul.f32 %v336, 1.442695
  %v354 = vpow.pop %v353
  %v355 = vmul.f32 %v337, 1.442695
  %v356 = vpow.pop %v355
  %v357 = vmul.f32 %v338, 1.442695
  %v358 = vpow.pop %v357
  %v359 = vmul.f32 %v339, 1.442695
  %v360 = vpow.pop %v359
  %v361 = vmul.f32 %v340, 1.442695
  %v362 = vpow.pop %v361
  %v363 = vmul.f32 %v341, 1.442695
  %v364 = vpow.pop %v363
  %v365 = vmul.f32 %v342, 1.442695
  %v366 = vpow.pop %v365
  %v367 = vmul.f32 %v343, 1.442695
  %v368 = vpow.pop %v367
  %v369 = vmul.f32 %v344, 1.442695
  %v370 = vpow.pop %v369
  %v371 = vmul.f32 %v345, 1.442695
  %v372 = vpow.pop %v371
  %v373 = vmul.f32 %v346, 1.442695
  %v374 = vpow.pop %v373
  %v375 = vmul.f32 %v347, 1.442695
  %v376 = vpow.pop %v375
  %v377 = vmul.f32 %v348, 1.442695
  %v378 = vpow.pop %v377
  %v379 = vmul.f32 %v349, 1.442695
  %v380 = vpow.pop %v379
  %v381 = vmul.f32 %v350, 1.442695
  %v382 = vpow.pop %v381
  %v383 = vadd.f32 %v352, 1.0
  %v384 = vadd.f32 %v354, 1.0
  %v385 = vadd.f32 %v356, 1.0
  %v386 = vadd.f32 %v358, 1.0
  %v387 = vadd.f32 %v360, 1.0
  %v388 = vadd.f32 %v362, 1.0
  %v389 = vadd.f32 %v364, 1.0
  %v390 = vadd.f32 %v366, 1.0
  %v391 = vadd.f32 %v368, 1.0
  %v392 = vadd.f32 %v370, 1.0
  %v393 = vadd.f32 %v372, 1.0
  %v394 = vadd.f32 %v374, 1.0
  %v395 = vadd.f32 %v376, 1.0
  %v396 = vadd.f32 %v378, 1.0
  %v397 = vadd.f32 %v380, 1.0
  %v398 = vadd.f32 %v382, 1.0
  %v399 = vrcp.pop %v383
  %v400 = vrcp.pop %v384
  %v401 = vrcp.pop %v385
  %v402 = vrcp.pop %v386
  %v403 = vrcp.pop %v387
  %v404 = vrcp.pop %v388
  %v405 = vrcp.pop %v389
  %v406 = vrcp.pop %v390
  %v407 = vrcp.pop %v391
  %v408 = vrcp.pop %v392
  %v409 = vrcp.pop %v393
  %v410 = vrcp.pop %v394
  %v411 = vrcp.pop %v395
  %v412 = vrcp.pop %v396
  %v413 = vrcp.pop %v397
  %v414 = vrcp.pop %v398
  %vm415 = vcmask 7168
  %416 = vst.msk [vmem:[%s5] sm:$0xff] %vm415, %v399
  %417 = vst.msk [vmem:[%s5 + $0x8] sm:$0xff] %vm415, %v400
  %418 = vst.msk [vmem:[%s5 + $0x10] sm:$0xff] %vm415, %v401
  %419 = vst.msk [vmem:[%s5 + $0x18] sm:$0xff] %vm415, %v402
  %420 = vst.msk [vmem:[%s5 + $0x20] sm:$0xff] %vm415, %v403
  %421 = vst.msk [vmem:[%s5 + $0x28] sm:$0xff] %vm415, %v404
  %422 = vst.msk [vmem:[%s5 + $0x30] sm:$0xff] %vm415, %v405
  %423 = vst.msk [vmem:[%s5 + $0x38] sm:$0xff] %vm415, %v406
  %424 = vst.msk [vmem:[%s5 + $0x40] sm:$0xff] %vm415, %v407
  %425 = vst.msk [vmem:[%s5 + $0x48] sm:$0xff] %vm415, %v408
  %426 = vst.msk [vmem:[%s5 + $0x50] sm:$0xff] %vm415, %v409
  %427 = vst.msk [vmem:[%s5 + $0x58] sm:$0xff] %vm415, %v410
  %428 = vst.msk [vmem:[%s5 + $0x60] sm:$0xff] %vm415, %v411
  %429 = vst.msk [vmem:[%s5 + $0x68] sm:$0xff] %vm415, %v412
  %430 = vst.msk [vmem:[%s5 + $0x70] sm:$0xff] %vm415, %v413
  %431 = vst.msk [vmem:[%s5 + $0x78] sm:$0xff] %vm415, %v414
  // Predicated region
  $region22: #{tpu_custom_call.1} parent=0 // pred_check
    _
  $region23: #{tpu_custom_call.1} parent=0 // pred_check_branch
    %433 = sbr.rel (0) target = $region25
  $region24: #{tpu_custom_call.1} parent=0 // pred_region
    _
  $region25: #{tpu_custom_call.1} parent=0 // pred_fallthru
    _
  // Predicated region
  $region26: #{tpu_custom_call.1} parent=0 // pred_check
    _
  $region27: #{tpu_custom_call.1} parent=0 // pred_check_branch
    %435 = sbr.rel (0) target = $region29
  $region28: #{tpu_custom_call.1} parent=0 // pred_region
    _
  $region29: #{tpu_custom_call.1} parent=0 // pred_fallthru
    _

</llo_original>
